<compile_context>
chip_gen: v5e
topology: v5e:2x2
jax: 0.10.0
libtpu: 0.0.40
codegen_flags: <defaults>
</compile_context>

<pallas_src>
import math
import functools

import jax
import jax.numpy as jnp
import numpy as np
from jax import lax
from jax.experimental import pallas as pl
from jax.experimental.pallas import tpu as pltpu


def _fixed_embedding_table(c_in, d_model):
    """FixedEmbedding sinusoidal table (c_in, d_model)."""
    w = np.zeros((c_in, d_model), dtype=np.float32)
    position = np.arange(0, c_in, dtype=np.float32)[:, None]
    div_term = np.exp(
        np.arange(0, d_model, 2, dtype=np.float32) * -(math.log(10000.0) / d_model)
    )
    w[:, 0::2] = np.sin(position * div_term)
    w[:, 1::2] = np.cos(position * div_term)
    return jnp.asarray(w)


def _data_embedding_kernel(x_ref, mark_ref, w_ref, o_ref, *, k_hot):
    """Fused DataEmbedding tile.

    x_ref    : (TB, L, C)   values, compute dtype
    mark_ref : (TB, L, 5)   int32 offset-adjusted columns
                            [hour, wday+24, day+31, month+63, node+76]
    w_ref    : (K, D)       fused table [conv(3C)|hour|wday|day|month|geo|pad], compute dtype
    o_ref    : (TB, L, D)   output dtype
    """
    TB, L, C = x_ref.shape
    K, D = w_ref.shape
    cdt = w_ref.dtype

    # --- TokenEmbedding: circular Conv1d(k=3, no bias) taps via XLU rolls ---
    x = x_ref[...]                                   # (TB, L, C), already compute dtype
    x_m1 = pltpu.roll(x, shift=1, axis=1)            # x[t-1]  (circular wrap)
    x_p1 = pltpu.roll(x, shift=L - 1, axis=1)        # x[t+1]  (circular wrap)

    # --- Temporal + geo multi-hot: disjoint ranges -> boolean ORs, single cast ---
    xm = mark_ref[...]                                               # (TB, L, 5) int32
    iota = lax.broadcasted_iota(jnp.int32, (TB, L, k_hot), 2)
    hot = ((iota == xm[..., 0:1]) | (iota == xm[..., 1:2]) | (iota == xm[..., 2:3])
           | (iota == xm[..., 3:4]) | (iota == xm[..., 4:5]))

    # --- ONE fused K-wide contraction on the MXU ---
    lhs = jnp.concatenate([x_m1, x, x_p1, hot.astype(cdt)], axis=-1)  # (TB, L, K)
    out = jnp.dot(lhs.reshape(TB * L, K), w_ref[...],
                  preferred_element_type=jnp.float32)                 # (TB*L, D) f32 acc
    # TODO(synk): nn.Dropout(p=0.1) is identity in eval mode; training-mode dropout not applied.
    o_ref[...] = out.reshape(TB, L, D).astype(o_ref.dtype)


def _vmem_block_bytes(shape, dtype):
    """VMEM footprint of one block, accounting for lane (128) / sublane (8*pack) padding."""
    itemsize = jnp.dtype(dtype).itemsize
    dims = list(shape)
    if len(dims) >= 1:
        dims[-1] = -(-dims[-1] // 128) * 128
    if len(dims) >= 2:
        sub = 8 * max(1, 4 // itemsize)
        dims[-2] = -(-dims[-2] // sub) * sub
    n = 1
    for d in dims:
        n *= d
    return n * itemsize


def _tpu_vmem_and_cores():
    """Per-TensorCore VMEM capacity and TC-per-chip estimate (generation-aware)."""
    vmem = 128 << 20
    try:
        info = pltpu.get_tpu_info()
        vmem = int(getattr(info, "vmem_capacity_bytes", vmem))
    except Exception:
        pass
    # v7x: 64 MiB VMEM per TC and 2 TCs/chip; v5e/v6e: 128 MiB, 1 TC.
    cores = 2 if vmem <= (64 << 20) else 1
    return vmem, cores


def _choose_tb(B, per_tb_bytes, budget, cores):
    """Largest divisor of B fitting the budget; on multi-TC chips keep grid % cores == 0."""
    divisors = [d for d in range(1, B + 1) if B % d == 0]
    fitting = [d for d in divisors if per_tb_bytes(d) <= budget]
    if not fitting:
        return 1
    if cores > 1:
        balanced = [d for d in fitting if (B // d) % cores == 0]
        if balanced:
            return max(balanced)
    return max(fitting)


def data_embedding(x, x_mark, params, node_num, *,
                   compute_dtype=jnp.float32, out_dtype=jnp.float32):
    B, L, C = x.shape
    D = params["w_geo"].shape[1]
    if B % node_num != 0:
        raise ValueError("B must be a multiple of node_num (PyTorch repeat/view semantics).")

    # --- GeoPositionalEmbedding: batch-invariant Linear hoisted; rows folded into the table ---
    geo_emb = params["geo_pos"] @ params["w_geo"] + params["b_geo"]          # (node_num, D)

    hour_tab, wday_tab = params["hour_tab"], params["wday_tab"]
    day_tab, month_tab = params["day_tab"], params["month_tab"]
    hour_n, wday_n, day_n = hour_tab.shape[0], wday_tab.shape[0], day_tab.shape[0]
    month_n = month_tab.shape[0]
    t_rows = hour_n + wday_n + day_n + month_n                               # 76 for freq='h'

    # --- Fused contraction weight: [conv taps | temporal tables | geo rows | zero pad] ---
    w_conv_flat = params["w_conv"].reshape(3 * C, D)                         # tap-major rows
    k_req = 3 * C + t_rows + node_num
    K = 128 if k_req <= 128 else -(-k_req // 128) * 128
    k_hot = K - 3 * C
    fused_w = jnp.concatenate(
        [w_conv_flat, hour_tab, wday_tab, day_tab, month_tab, geo_emb], axis=0)
    fused_w = jnp.pad(fused_w, ((0, K - k_req), (0, 0))).astype(compute_dtype)

    # --- Offset-adjusted multi-hot indices precomputed here (no in-kernel adds) ---
    xm = x_mark.astype(jnp.int32)
    off_wday = hour_n
    off_day = hour_n + wday_n
    off_month = hour_n + wday_n + day_n
    off_geo = t_rows
    node_ids = (jnp.arange(B, dtype=jnp.int32) % node_num)
    marks = jnp.stack(
        [xm[..., 3],                                                # hour
         xm[..., 2] + off_wday,                                     # weekday
         xm[..., 1] + off_day,                                      # day
         xm[..., 0] + off_month,                                    # month
         jnp.broadcast_to(node_ids[:, None], (B, L)) + off_geo],    # geo node id
        axis=-1)                                                    # (B, L, 5) int32
    n_mark = marks.shape[-1]

    x_c = x.astype(compute_dtype)

    # --- Generation-aware VMEM budget / core count and batch-tile selection ---
    vmem_cap, cores = _tpu_vmem_and_cores()
    budget = (24 << 20) if vmem_cap <= (64 << 20) else (48 << 20)

    def per_tb_bytes(tb):
        b = 2 * _vmem_block_bytes((tb, L, C), compute_dtype)        # x (lane-padded)
        b += 2 * _vmem_block_bytes((tb, L, n_mark), jnp.int32)      # marks (lane-padded)
        b += 2 * _vmem_block_bytes((tb, L, D), out_dtype)           # output
        b += 2 * _vmem_block_bytes((K, D), compute_dtype)           # fused table (resident)
        return b

    TB = _choose_tb(B, per_tb_bytes, budget, cores)
    grid = (B // TB,)

    kernel = functools.partial(_data_embedding_kernel, k_hot=k_hot)

    return pl.pallas_call(
        kernel,
        out_shape=jax.ShapeDtypeStruct((B, L, D), out_dtype),
        grid=grid,
        in_specs=[
            pl.BlockSpec((TB, L, C), lambda b: (b, 0, 0)),          # values
            pl.BlockSpec((TB, L, n_mark), lambda b: (b, 0, 0)),     # adjusted marks
            pl.BlockSpec((K, D), lambda b: (0, 0)),                 # fused table (resident)
        ],
        out_specs=pl.BlockSpec((TB, L, D), lambda b: (b, 0, 0)),
        compiler_params=pltpu.CompilerParams(
            dimension_semantics=("parallel",),
            vmem_limit_bytes=max(budget, 32 << 20)),
    )(x_c, marks, fused_w)


def _reference(x, x_mark, params, node_num):
    B, L, C = x.shape
    x_m1 = jnp.roll(x, 1, axis=1)
    x_p1 = jnp.roll(x, -1, axis=1)
    tok = (x_m1 @ params["w_conv"][0]
           + x @ params["w_conv"][1]
           + x_p1 @ params["w_conv"][2])
    temp = (params["hour_tab"][x_mark[..., 3]]
            + params["wday_tab"][x_mark[..., 2]]
            + params["day_tab"][x_mark[..., 1]]
            + params["month_tab"][x_mark[..., 0]])
    geo = params["geo_pos"] @ params["w_geo"] + params["b_geo"]              # (node_num, D)
    geo_b = jnp.tile(geo[None, :, None, :], (B // node_num, 1, L, 1)).reshape(B, L, -1)
    return tok + temp + geo_b


if __name__ == "__main__":
    key = jax.random.PRNGKey(0)
    B, L, c_in, d_model = 8, 8, 4, 128          # d_model multiple of 128 -> lane-dense stores
    node_num = 2
    n_stations = 6                              # synthetic stations_sorted.npy rows
    geo_in = 3 * (n_stations // node_num)       # Linear input dim = 9

    ks = jax.random.split(key, 8)
    x = jax.random.normal(ks[0], (B, L, c_in), jnp.float32)
    month = jax.random.randint(ks[1], (B, L, 1), 0, 13)
    day = jax.random.randint(ks[2], (B, L, 1), 0, 32)
    wday = jax.random.randint(ks[3], (B, L, 1), 0, 7)
    hour = jax.random.randint(ks[4], (B, L, 1), 0, 24)
    x_mark = jnp.concatenate([month, day, wday, hour], axis=-1).astype(jnp.int32)

    # TokenEmbedding Conv1d weight (d_model, c_in, 3), kaiming_normal fan_in / leaky_relu
    fan_in = c_in * 3
    gain = math.sqrt(2.0 / (1.0 + 0.01 ** 2))
    w_conv_nck = gain / math.sqrt(fan_in) * jax.random.normal(
        ks[5], (d_model, c_in, 3), jnp.float32)
    w_conv = jnp.transpose(w_conv_nck, (2, 1, 0))        # (3, c_in, d_model): tap, in, out

    # GeoPositionalEmbedding Linear(geo_in, d_model)
    bound = 1.0 / math.sqrt(geo_in)
    w_geo = jax.random.uniform(ks[6], (geo_in, d_model), jnp.float32, -bound, bound)
    b_geo = jax.random.uniform(ks[7], (1, d_model), jnp.float32, -bound, bound)

    # synthetic standardized station positions, reshaped as in DataEmbedding.forward
    geo_raw = jax.random.normal(jax.random.PRNGKey(42), (n_stations, 3), jnp.float32)
    geo_raw = (geo_raw - geo_raw.mean(0)) / (geo_raw.std(0) + 1e-8)          # StandardScaler
    geo_pos = geo_raw.reshape(node_num, n_stations // node_num, 3).reshape(node_num, geo_in)

    params = dict(
        w_conv=w_conv, w_geo=w_geo, b_geo=b_geo, geo_pos=geo_pos,
        hour_tab=_fixed_embedding_table(24, d_model),
        wday_tab=_fixed_embedding_table(7, d_model),
        day_tab=_fixed_embedding_table(32, d_model),
        month_tab=_fixed_embedding_table(13, d_model),
    )

    ref = _reference(x, x_mark, params, node_num)

    # float32 path: strict correctness check.
    out = jax.block_until_ready(data_embedding(x, x_mark, params, node_num))
    assert out.shape == (B, L, d_model)
    assert out.dtype == jnp.float32
    assert jnp.allclose(out, ref, atol=1e-4, rtol=1e-4), "mismatch vs pure-JAX reference (f32)"

    # bf16 MXU path (recommended on v6e/v7x; on v5e keep the f32 default): loose tolerance.
    out_bf16 = jax.block_until_ready(
        data_embedding(x, x_mark, params, node_num, compute_dtype=jnp.bfloat16))
    assert jnp.allclose(out_bf16, ref, atol=1e-1, rtol=1e-1), "mismatch vs reference (bf16)"

    # bf16 output (halves HBM writeback, the dominant traffic): loose tolerance.
    out_bf16o = jax.block_until_ready(
        data_embedding(x, x_mark, params, node_num,
                       compute_dtype=jnp.bfloat16, out_dtype=jnp.bfloat16))
    assert out_bf16o.dtype == jnp.bfloat16
    assert jnp.allclose(out_bf16o.astype(jnp.float32), ref, atol=1e-1, rtol=1e-1), \
        "mismatch vs reference (bf16 out)"

    print("KERNEL_OK")
</pallas_src>

<mosaic_0001>
module attributes {stable_mosaic.version = 11 : i64} {
  func.func @_data_embedding_kernel(%arg0: i32, %arg1: memref<8x8x4xf32, #tpu.memory_space<vmem>>, %arg2: memref<8x8x5xi32, #tpu.memory_space<vmem>>, %arg3: memref<128x128xf32, #tpu.memory_space<vmem>>, %arg4: memref<8x8x128xf32, #tpu.memory_space<vmem>>) attributes {dimension_semantics = [#tpu.dimension_semantics<parallel>], iteration_bounds = array<i64: 1>, scalar_prefetch = 0 : i64, scratch_operands = 0 : i64, tpu.core_type = #tpu.core_type<tc>, window_params = [{transform_indices = @transform_0, window_bounds = array<i64: 8, 8, 4>}, {transform_indices = @transform_1, window_bounds = array<i64: 8, 8, 5>}, {pipeline_mode = #tpu.pipeline_mode<synchronous>, transform_indices = @transform_2, window_bounds = array<i64: 128, 128>}, {transform_indices = @transform_3, window_bounds = array<i64: 8, 8, 128>}]} {
    %c0 = arith.constant 0 : index
    %c0_0 = arith.constant 0 : index
    %c0_1 = arith.constant 0 : index
    %0 = vector.load %arg1[%c0, %c0_0, %c0_1] : memref<8x8x4xf32, #tpu.memory_space<vmem>>, vector<8x8x4xf32>
    %c1_i32 = arith.constant 1 : i32
    %1 = tpu.dynamic_rotate %0 by %c1_i32 dim 1 : vector<8x8x4xf32>, i32 -> vector<8x8x4xf32>
    %c7_i32 = arith.constant 7 : i32
    %2 = tpu.dynamic_rotate %0 by %c7_i32 dim 1 : vector<8x8x4xf32>, i32 -> vector<8x8x4xf32>
    %c0_2 = arith.constant 0 : index
    %c0_3 = arith.constant 0 : index
    %c0_4 = arith.constant 0 : index
    %3 = vector.load %arg2[%c0_2, %c0_3, %c0_4] : memref<8x8x5xi32, #tpu.memory_space<vmem>>, vector<8x8x5xi32>
    %4 = tpu.iota {dimensions = array<i32: 2>} : vector<8x8x116xi32>
    %5 = vector.extract_strided_slice %3 {offsets = [0, 0, 0], sizes = [8, 8, 1], strides = [1, 1, 1]} : vector<8x8x5xi32> to vector<8x8x1xi32>
    %6 = vector.broadcast %5 : vector<8x8x1xi32> to vector<8x8x116xi32>
    %7 = arith.cmpi eq, %4, %6 : vector<8x8x116xi32>
    %8 = vector.extract_strided_slice %3 {offsets = [0, 0, 1], sizes = [8, 8, 1], strides = [1, 1, 1]} : vector<8x8x5xi32> to vector<8x8x1xi32>
    %9 = vector.broadcast %8 : vector<8x8x1xi32> to vector<8x8x116xi32>
    %10 = arith.cmpi eq, %4, %9 : vector<8x8x116xi32>
    %11 = arith.ori %7, %10 : vector<8x8x116xi1>
    %12 = vector.extract_strided_slice %3 {offsets = [0, 0, 2], sizes = [8, 8, 1], strides = [1, 1, 1]} : vector<8x8x5xi32> to vector<8x8x1xi32>
    %13 = vector.broadcast %12 : vector<8x8x1xi32> to vector<8x8x116xi32>
    %14 = arith.cmpi eq, %4, %13 : vector<8x8x116xi32>
    %15 = arith.ori %11, %14 : vector<8x8x116xi1>
    %16 = vector.extract_strided_slice %3 {offsets = [0, 0, 3], sizes = [8, 8, 1], strides = [1, 1, 1]} : vector<8x8x5xi32> to vector<8x8x1xi32>
    %17 = vector.broadcast %16 : vector<8x8x1xi32> to vector<8x8x116xi32>
    %18 = arith.cmpi eq, %4, %17 : vector<8x8x116xi32>
    %19 = arith.ori %15, %18 : vector<8x8x116xi1>
    %20 = vector.extract_strided_slice %3 {offsets = [0, 0, 4], sizes = [8, 8, 1], strides = [1, 1, 1]} : vector<8x8x5xi32> to vector<8x8x1xi32>
    %21 = vector.broadcast %20 : vector<8x8x1xi32> to vector<8x8x116xi32>
    %22 = arith.cmpi eq, %4, %21 : vector<8x8x116xi32>
    %23 = arith.ori %19, %22 : vector<8x8x116xi1>
    %24 = arith.extui %23 : vector<8x8x116xi1> to vector<8x8x116xi32>
    %25 = arith.sitofp %24 : vector<8x8x116xi32> to vector<8x8x116xf32>
    %26 = tpu.concatenate %1, %0, %2, %25 in 2 : vector<8x8x4xf32>, vector<8x8x4xf32>, vector<8x8x4xf32>, vector<8x8x116xf32> -> vector<8x8x128xf32>
    %27 = vector.shape_cast %26 : vector<8x8x128xf32> to vector<64x128xf32>
    %c0_5 = arith.constant 0 : index
    %c0_6 = arith.constant 0 : index
    %28 = vector.load %arg3[%c0_5, %c0_6] : memref<128x128xf32, #tpu.memory_space<vmem>>, vector<128x128xf32>
    %cst = arith.constant dense<0.000000e+00> : vector<64x128xf32>
    %29 = tpu.matmul %27, %28, %cst {dimension_numbers = #tpu.dot_dimension_numbers<[1], [0], [0], [1], [0, 0, 1, 1], [], []>} : vector<64x128xf32>, vector<128x128xf32>, vector<64x128xf32> -> vector<64x128xf32>
    %30 = vector.shape_cast %29 : vector<64x128xf32> to vector<8x8x128xf32>
    %c0_7 = arith.constant 0 : index
    %c0_8 = arith.constant 0 : index
    %c0_9 = arith.constant 0 : index
    %31 = vector.load %arg4[%c0_7, %c0_8, %c0_9] : memref<8x8x128xf32, #tpu.memory_space<vmem>>, vector<8x8x128xf32>
    tpu.vector_store %arg4[%c0_7, %c0_8, %c0_9], %30 {strides = array<i32>} : memref<8x8x128xf32, #tpu.memory_space<vmem>>, vector<8x8x128xf32>,
    return
  }
  func.func @transform_0(%arg0: i32) -> (i32, i32, i32) {
    %c0_i32 = arith.constant 0 : i32
    %c0_i32_0 = arith.constant 0 : i32
    %c0_i32_1 = arith.constant 0 : i32
    return %arg0, %c0_i32, %c0_i32_0 : i32, i32, i32
  }
  func.func @transform_1(%arg0: i32) -> (i32, i32, i32) {
    %c0_i32 = arith.constant 0 : i32
    %c0_i32_0 = arith.constant 0 : i32
    %c0_i32_1 = arith.constant 0 : i32
    return %arg0, %c0_i32, %c0_i32_0 : i32, i32, i32
  }
  func.func @transform_2(%arg0: i32) -> (i32, i32) {
    %c0_i32 = arith.constant 0 : i32
    %c0_i32_0 = arith.constant 0 : i32
    %c0_i32_1 = arith.constant 0 : i32
    return %c0_i32, %c0_i32_0 : i32, i32
  }
  func.func @transform_3(%arg0: i32) -> (i32, i32, i32) {
    %c0_i32 = arith.constant 0 : i32
    %c0_i32_0 = arith.constant 0 : i32
    %c0_i32_1 = arith.constant 0 : i32
    return %arg0, %c0_i32, %c0_i32_0 : i32, i32, i32
  }
}

</mosaic_0001>

<llo_original>
// kernel: tpu_custom_call.1
$region0: #{tpu_custom_call.1}
  #allocation0 [shape = 'u32[]', space=smem, size = 0x4, offset = 0x4, fixed_abs, tag = 'smem constant byte address 0x4 - core index']
  #allocation1 [shape = 'u32[72,128]{1,0:T(1,128)}', space=vmem, size = 0x9000, scoped, tag = 'internal scratch']
  %s0 = inlined_call_operand.vmem [shape: f32[8,8,4], index: 0, kind: input, shape index: {}]
  %s1 = inlined_call_operand.vmem [shape: s32[8,8,5], index: 1, kind: input, shape index: {}]
  %s2 = inlined_call_operand.vmem [shape: f32[128,128], index: 2, kind: input, shape index: {}]
  %s3 = inlined_call_operand.hbm [shape: f32[8,8,128], index: 3, kind: output, shape index: {}]
  %s4 = sld [smem:[#allocation0]]
  $region22: #{tpu_custom_call.1} parent=0
    _
  %s6 = ssub.s32 1, %s4
  %s7 = scalar_select 0, %s6, %s4
  $region1: #{tpu_custom_call.1} parent=0
    #allocation2 [shape = 'u8[32768]{0}', space=vmem, size = 0x8000, scoped, tag = 'output window, operand 0, single buffered']
    #allocation3 [shape = 's32[1]{0}', space=sflag, size = 0x4, scoped, tag = 'scoped memory for tpu_custom_call.1']
    %8 = vsyncpa [#allocation3], 0
    // Predicated region
    $region2: #{tpu_custom_call.1} parent=1 // pred_check
      _
    $region3: #{tpu_custom_call.1} parent=1 // pred_check_branch
      %10 = sbr.rel (0) target = $region5
    $region4: #{tpu_custom_call.1} parent=1 // pred_region
      _
    $region5: #{tpu_custom_call.1} parent=1 // pred_fallthru
      _
    // Predicated region
    $region6: #{tpu_custom_call.1} parent=1 // pred_check
      _
    $region7: #{tpu_custom_call.1} parent=1 // pred_check_branch
      %12 = sbr.rel (0) target = $region9
    $region8: #{tpu_custom_call.1} parent=1 // pred_region
      _
    $region9: #{tpu_custom_call.1} parent=1 // pred_fallthru
      _
    // Predicated region
    $region10: #{tpu_custom_call.1} parent=1 // pred_check
      _
    $region11: #{tpu_custom_call.1} parent=1 // pred_check_branch
      %14 = sbr.rel (0) target = $region13
    $region12: #{tpu_custom_call.1} parent=1 // pred_region
      _
    $region13: #{tpu_custom_call.1} parent=1 // pred_fallthru
      _
    %v15 = vld [vmem:[%s0] sm:$0xff]
    %v16 = vld [vmem:[%s0 + $0x8] sm:$0xff]
    %v17 = vld [vmem:[%s0 + $0x10] sm:$0xff]
    %v18 = vld [vmem:[%s0 + $0x18] sm:$0xff]
    %v19 = vld [vmem:[%s0 + $0x20] sm:$0xff]
    %v20 = vld [vmem:[%s0 + $0x28] sm:$0xff]
    %v21 = vld [vmem:[%s0 + $0x30] sm:$0xff]
    %v22 = vld [vmem:[%s0 + $0x38] sm:$0xff]
    %v23 = vrot.slane %v15, 7
    %v24 = vrot.slane %v16, 7
    %v25 = vrot.slane %v17, 7
    %v26 = vrot.slane %v18, 7
    %v27 = vrot.slane %v19, 7
    %v28 = vrot.slane %v20, 7
    %v29 = vrot.slane %v21, 7
    %v30 = vrot.slane %v22, 7
    %v31 = vrot.slane %v15, 1
    %v32 = vrot.slane %v16, 1
    %v33 = vrot.slane %v17, 1
    %v34 = vrot.slane %v18, 1
    %v35 = vrot.slane %v19, 1
    %v36 = vrot.slane %v20, 1
    %v37 = vrot.slane %v21, 1
    %v38 = vrot.slane %v22, 1
    %v39 = vld [vmem:[%s1] sm:$0xff]
    %v40 = vld [vmem:[%s1 + $0x8] sm:$0xff]
    %v41 = vld [vmem:[%s1 + $0x10] sm:$0xff]
    %v42 = vld [vmem:[%s1 + $0x18] sm:$0xff]
    %v43 = vld [vmem:[%s1 + $0x20] sm:$0xff]
    %v44 = vld [vmem:[%s1 + $0x28] sm:$0xff]
    %v45 = vld [vmem:[%s1 + $0x30] sm:$0xff]
    %v46 = vld [vmem:[%s1 + $0x38] sm:$0xff]
    %v47 = vlaneseq
    %v48 = vand.u32 %v47, 127
    %49 = vset.pattern.permute.xlu0 0
    %50 = vperm.xlu0 %49, %v39
    %v51 = vpop.permute.xlu0 %50
    %52 = vset.pattern.permute.xlu0 0
    %53 = vperm.xlu0 %52, %v40
    %v54 = vpop.permute.xlu0 %53
    %55 = vset.pattern.permute.xlu0 0
    %56 = vperm.xlu0 %55, %v41
    %v57 = vpop.permute.xlu0 %56
    %58 = vset.pattern.permute.xlu0 0
    %59 = vperm.xlu0 %58, %v42
    %v60 = vpop.permute.xlu0 %59
    %61 = vset.pattern.permute.xlu0 0
    %62 = vperm.xlu0 %61, %v43
    %v63 = vpop.permute.xlu0 %62
    %64 = vset.pattern.permute.xlu0 0
    %65 = vperm.xlu0 %64, %v44
    %v66 = vpop.permute.xlu0 %65
    %67 = vset.pattern.permute.xlu0 0
    %68 = vperm.xlu0 %67, %v45
    %v69 = vpop.permute.xlu0 %68
    %70 = vset.pattern.permute.xlu0 0
    %71 = vperm.xlu0 %70, %v46
    %v72 = vpop.permute.xlu0 %71
    %vm73 = vcmp.eq.s32.totalorder %v48, %v51
    %vm74 = vcmp.eq.s32.totalorder %v48, %v54
    %vm75 = vcmp.eq.s32.totalorder %v48, %v57
    %vm76 = vcmp.eq.s32.totalorder %v48, %v60
    %vm77 = vcmp.eq.s32.totalorder %v48, %v63
    %vm78 = vcmp.eq.s32.totalorder %v48, %v66
    %vm79 = vcmp.eq.s32.totalorder %v48, %v69
    %vm80 = vcmp.eq.s32.totalorder %v48, %v72
    %81 = vset.pattern.permute.xlu0 1
    %82 = vperm.xlu0 %81, %v39
    %v83 = vpop.permute.xlu0 %82
    %84 = vset.pattern.permute.xlu0 1
    %85 = vperm.xlu0 %84, %v40
    %v86 = vpop.permute.xlu0 %85
    %87 = vset.pattern.permute.xlu0 1
    %88 = vperm.xlu0 %87, %v41
    %v89 = vpop.permute.xlu0 %88
    %90 = vset.pattern.permute.xlu0 1
    %91 = vperm.xlu0 %90, %v42
    %v92 = vpop.permute.xlu0 %91
    %93 = vset.pattern.permute.xlu0 1
    %94 = vperm.xlu0 %93, %v43
    %v95 = vpop.permute.xlu0 %94
    %96 = vset.pattern.permute.xlu0 1
    %97 = vperm.xlu0 %96, %v44
    %v98 = vpop.permute.xlu0 %97
    %99 = vset.pattern.permute.xlu0 1
    %100 = vperm.xlu0 %99, %v45
    %v101 = vpop.permute.xlu0 %100
    %102 = vset.pattern.permute.xlu0 1
    %103 = vperm.xlu0 %102, %v46
    %v104 = vpop.permute.xlu0 %103
    %vm105 = vcmp.eq.s32.totalorder %v48, %v83
    %vm106 = vcmp.eq.s32.totalorder %v48, %v86
    %vm107 = vcmp.eq.s32.totalorder %v48, %v89
    %vm108 = vcmp.eq.s32.totalorder %v48, %v92
    %vm109 = vcmp.eq.s32.totalorder %v48, %v95
    %vm110 = vcmp.eq.s32.totalorder %v48, %v98
    %vm111 = vcmp.eq.s32.totalorder %v48, %v101
    %vm112 = vcmp.eq.s32.totalorder %v48, %v104
    %vm113 = vmor %vm73, %vm105
    %vm114 = vmor %vm74, %vm106
    %vm115 = vmor %vm75, %vm107
    %vm116 = vmor %vm76, %vm108
    %vm117 = vmor %vm77, %vm109
    %vm118 = vmor %vm78, %vm110
    %vm119 = vmor %vm79, %vm111
    %vm120 = vmor %vm80, %vm112
    %121 = vset.pattern.permute.xlu0 2
    %122 = vperm.xlu0 %121, %v39
    %v123 = vpop.permute.xlu0 %122
    %124 = vset.pattern.permute.xlu0 2
    %125 = vperm.xlu0 %124, %v40
    %v126 = vpop.permute.xlu0 %125
    %127 = vset.pattern.permute.xlu0 2
    %128 = vperm.xlu0 %127, %v41
    %v129 = vpop.permute.xlu0 %128
    %130 = vset.pattern.permute.xlu0 2
    %131 = vperm.xlu0 %130, %v42
    %v132 = vpop.permute.xlu0 %131
    %133 = vset.pattern.permute.xlu0 2
    %134 = vperm.xlu0 %133, %v43
    %v135 = vpop.permute.xlu0 %134
    %136 = vset.pattern.permute.xlu0 2
    %137 = vperm.xlu0 %136, %v44
    %v138 = vpop.permute.xlu0 %137
    %139 = vset.pattern.permute.xlu0 2
    %140 = vperm.xlu0 %139, %v45
    %v141 = vpop.permute.xlu0 %140
    %142 = vset.pattern.permute.xlu0 2
    %143 = vperm.xlu0 %142, %v46
    %v144 = vpop.permute.xlu0 %143
    %vm145 = vcmp.eq.s32.totalorder %v48, %v123
    %vm146 = vcmp.eq.s32.totalorder %v48, %v126
    %vm147 = vcmp.eq.s32.totalorder %v48, %v129
    %vm148 = vcmp.eq.s32.totalorder %v48, %v132
    %vm149 = vcmp.eq.s32.totalorder %v48, %v135
    %vm150 = vcmp.eq.s32.totalorder %v48, %v138
    %vm151 = vcmp.eq.s32.totalorder %v48, %v141
    %vm152 = vcmp.eq.s32.totalorder %v48, %v144
    %vm153 = vmor %vm113, %vm145
    %vm154 = vmor %vm114, %vm146
    %vm155 = vmor %vm115, %vm147
    %vm156 = vmor %vm116, %vm148
    %vm157 = vmor %vm117, %vm149
    %vm158 = vmor %vm118, %vm150
    %vm159 = vmor %vm119, %vm151
    %vm160 = vmor %vm120, %vm152
    %161 = vset.pattern.permute.xlu0 3
    %162 = vperm.xlu0 %161, %v39
    %v163 = vpop.permute.xlu0 %162
    %164 = vset.pattern.permute.xlu0 3
    %165 = vperm.xlu0 %164, %v40
    %v166 = vpop.permute.xlu0 %165
    %167 = vset.pattern.permute.xlu0 3
    %168 = vperm.xlu0 %167, %v41
    %v169 = vpop.permute.xlu0 %168
    %170 = vset.pattern.permute.xlu0 3
    %171 = vperm.xlu0 %170, %v42
    %v172 = vpop.permute.xlu0 %171
    %173 = vset.pattern.permute.xlu0 3
    %174 = vperm.xlu0 %173, %v43
    %v175 = vpop.permute.xlu0 %174
    %176 = vset.pattern.permute.xlu0 3
    %177 = vperm.xlu0 %176, %v44
    %v178 = vpop.permute.xlu0 %177
    %179 = vset.pattern.permute.xlu0 3
    %180 = vperm.xlu0 %179, %v45
    %v181 = vpop.permute.xlu0 %180
    %182 = vset.pattern.permute.xlu0 3
    %183 = vperm.xlu0 %182, %v46
    %v184 = vpop.permute.xlu0 %183
    %vm185 = vcmp.eq.s32.totalorder %v48, %v163
    %vm186 = vcmp.eq.s32.totalorder %v48, %v166
    %vm187 = vcmp.eq.s32.totalorder %v48, %v169
    %vm188 = vcmp.eq.s32.totalorder %v48, %v172
    %vm189 = vcmp.eq.s32.totalorder %v48, %v175
    %vm190 = vcmp.eq.s32.totalorder %v48, %v178
    %vm191 = vcmp.eq.s32.totalorder %v48, %v181
    %vm192 = vcmp.eq.s32.totalorder %v48, %v184
    %vm193 = vmor %vm153, %vm185
    %vm194 = vmor %vm154, %vm186
    %vm195 = vmor %vm155, %vm187
    %vm196 = vmor %vm156, %vm188
    %vm197 = vmor %vm157, %vm189
    %vm198 = vmor %vm158, %vm190
    %vm199 = vmor %vm159, %vm191
    %vm200 = vmor %vm160, %vm192
    %201 = vset.pattern.permute.xlu0 4
    %202 = vperm.xlu0 %201, %v39
    %v203 = vpop.permute.xlu0 %202
    %204 = vset.pattern.permute.xlu0 4
    %205 = vperm.xlu0 %204, %v40
    %v206 = vpop.permute.xlu0 %205
    %207 = vset.pattern.permute.xlu0 4
    %208 = vperm.xlu0 %207, %v41
    %v209 = vpop.permute.xlu0 %208
    %210 = vset.pattern.permute.xlu0 4
    %211 = vperm.xlu0 %210, %v42
    %v212 = vpop.permute.xlu0 %211
    %213 = vset.pattern.permute.xlu0 4
    %214 = vperm.xlu0 %213, %v43
    %v215 = vpop.permute.xlu0 %214
    %216 = vset.pattern.permute.xlu0 4
    %217 = vperm.xlu0 %216, %v44
    %v218 = vpop.permute.xlu0 %217
    %219 = vset.pattern.permute.xlu0 4
    %220 = vperm.xlu0 %219, %v45
    %v221 = vpop.permute.xlu0 %220
    %222 = vset.pattern.permute.xlu0 4
    %223 = vperm.xlu0 %222, %v46
    %v224 = vpop.permute.xlu0 %223
    %vm225 = vcmp.eq.s32.totalorder %v48, %v203
    %vm226 = vcmp.eq.s32.totalorder %v48, %v206
    %vm227 = vcmp.eq.s32.totalorder %v48, %v209
    %vm228 = vcmp.eq.s32.totalorder %v48, %v212
    %vm229 = vcmp.eq.s32.totalorder %v48, %v215
    %vm230 = vcmp.eq.s32.totalorder %v48, %v218
    %vm231 = vcmp.eq.s32.totalorder %v48, %v221
    %vm232 = vcmp.eq.s32.totalorder %v48, %v224
    %vm233 = vmor %vm193, %vm225
    %vm234 = vmor %vm194, %vm226
    %vm235 = vmor %vm195, %vm227
    %vm236 = vmor %vm196, %vm228
    %vm237 = vmor %vm197, %vm229
    %vm238 = vmor %vm198, %vm230
    %vm239 = vmor %vm199, %vm231
    %vm240 = vmor %vm200, %vm232
    %v241 = vsel %vm233, 1, 0
    %v242 = vsel %vm234, 1, 0
    %v243 = vsel %vm235, 1, 0
    %v244 = vsel %vm236, 1, 0
    %v245 = vsel %vm237, 1, 0
    %v246 = vsel %vm238, 1, 0
    %v247 = vsel %vm239, 1, 0
    %v248 = vsel %vm240, 1, 0
    %v249 = vcvt.s32.f32 %v241
    %v250 = vcvt.s32.f32 %v242
    %v251 = vcvt.s32.f32 %v243
    %v252 = vcvt.s32.f32 %v244
    %v253 = vcvt.s32.f32 %v245
    %v254 = vcvt.s32.f32 %v246
    %v255 = vcvt.s32.f32 %v247
    %v256 = vcvt.s32.f32 %v248
    %265 = vrot.lane.b32.xlu0 %v15, 4
    %v266 = vpop.permute.xlu0 %265
    %267 = vrot.lane.b32.xlu0 %v16, 4
    %v268 = vpop.permute.xlu0 %267
    %269 = vrot.lane.b32.xlu0 %v17, 4
    %v270 = vpop.permute.xlu0 %269
    %271 = vrot.lane.b32.xlu0 %v18, 4
    %v272 = vpop.permute.xlu0 %271
    %273 = vrot.lane.b32.xlu0 %v19, 4
    %v274 = vpop.permute.xlu0 %273
    %275 = vrot.lane.b32.xlu0 %v20, 4
    %v276 = vpop.permute.xlu0 %275
    %277 = vrot.lane.b32.xlu0 %v21, 4
    %v278 = vpop.permute.xlu0 %277
    %279 = vrot.lane.b32.xlu0 %v22, 4
    %v280 = vpop.permute.xlu0 %279
    %297 = vrot.lane.b32.xlu0 %v31, 8
    %v298 = vpop.permute.xlu0 %297
    %299 = vrot.lane.b32.xlu0 %v32, 8
    %v300 = vpop.permute.xlu0 %299
    %301 = vrot.lane.b32.xlu0 %v33, 8
    %v302 = vpop.permute.xlu0 %301
    %303 = vrot.lane.b32.xlu0 %v34, 8
    %v304 = vpop.permute.xlu0 %303
    %305 = vrot.lane.b32.xlu0 %v35, 8
    %v306 = vpop.permute.xlu0 %305
    %307 = vrot.lane.b32.xlu0 %v36, 8
    %v308 = vpop.permute.xlu0 %307
    %309 = vrot.lane.b32.xlu0 %v37, 8
    %v310 = vpop.permute.xlu0 %309
    %311 = vrot.lane.b32.xlu0 %v38, 8
    %v312 = vpop.permute.xlu0 %311
    %329 = vrot.lane.b32.xlu0 %v249, 12
    %v330 = vpop.permute.xlu0 %329
    %331 = vrot.lane.b32.xlu0 %v250, 12
    %v332 = vpop.permute.xlu0 %331
    %333 = vrot.lane.b32.xlu0 %v251, 12
    %v334 = vpop.permute.xlu0 %333
    %335 = vrot.lane.b32.xlu0 %v252, 12
    %v336 = vpop.permute.xlu0 %335
    %337 = vrot.lane.b32.xlu0 %v253, 12
    %v338 = vpop.permute.xlu0 %337
    %339 = vrot.lane.b32.xlu0 %v254, 12
    %v340 = vpop.permute.xlu0 %339
    %341 = vrot.lane.b32.xlu0 %v255, 12
    %v342 = vpop.permute.xlu0 %341
    %343 = vrot.lane.b32.xlu0 %v256, 12
    %v344 = vpop.permute.xlu0 %343
    %vm353 = vcmask 31744
    %v354 = vsel %vm353, %v23, %v266
    %v355 = vsel %vm353, %v24, %v268
    %v356 = vsel %vm353, %v25, %v270
    %v357 = vsel %vm353, %v26, %v272
    %v358 = vsel %vm353, %v27, %v274
    %v359 = vsel %vm353, %v28, %v276
    %v360 = vsel %vm353, %v29, %v278
    %v361 = vsel %vm353, %v30, %v280
    %vm362 = vcmask 64512
    %v363 = vsel %vm362, %v354, %v298
    %v364 = vsel %vm362, %v355, %v300
    %v365 = vsel %vm362, %v356, %v302
    %v366 = vsel %vm362, %v357, %v304
    %v367 = vsel %vm362, %v358, %v306
    %v368 = vsel %vm362, %v359, %v308
    %v369 = vsel %vm362, %v360, %v310
    %v370 = vsel %vm362, %v361, %v312
    %vm371 = vcmask 97280
    %v372 = vsel %vm371, %v363, %v330
    %v373 = vsel %vm371, %v364, %v332
    %v374 = vsel %vm371, %v365, %v334
    %v375 = vsel %vm371, %v366, %v336
    %v376 = vsel %vm371, %v367, %v338
    %v377 = vsel %vm371, %v368, %v340
    %v378 = vsel %vm371, %v369, %v342
    %v379 = vsel %vm371, %v370, %v344
    %v380 = vld [vmem:[%s2] sm:$0xff]
    %v381 = vld [vmem:[%s2 + $0x8] sm:$0xff]
    %v382 = vld [vmem:[%s2 + $0x10] sm:$0xff]
    %v383 = vld [vmem:[%s2 + $0x18] sm:$0xff]
    %v384 = vld [vmem:[%s2 + $0x20] sm:$0xff]
    %v385 = vld [vmem:[%s2 + $0x28] sm:$0xff]
    %v386 = vld [vmem:[%s2 + $0x30] sm:$0xff]
    %v387 = vld [vmem:[%s2 + $0x38] sm:$0xff]
    %v388 = vld [vmem:[%s2 + $0x40] sm:$0xff]
    %v389 = vld [vmem:[%s2 + $0x48] sm:$0xff]
    %v390 = vld [vmem:[%s2 + $0x50] sm:$0xff]
    %v391 = vld [vmem:[%s2 + $0x58] sm:$0xff]
    %v392 = vld [vmem:[%s2 + $0x60] sm:$0xff]
    %v393 = vld [vmem:[%s2 + $0x68] sm:$0xff]
    %v394 = vld [vmem:[%s2 + $0x70] sm:$0xff]
    %v395 = vld [vmem:[%s2 + $0x78] sm:$0xff]
    %396 = vmatpush.msra.mxu0 %v395
    %397 = vmatpush.msra.mxu0 %v394
    %398 = vmatpush.msra.mxu0 %v393
    %399 = vmatpush.msra.mxu0 %v392
    %400 = vmatpush.msra.mxu0 %v391
    %401 = vmatpush.msra.mxu0 %v390
    %402 = vmatpush.msra.mxu0 %v389
    %403 = vmatpush.msra.mxu0 %v388
    %404 = vmatpush.msra.mxu0 %v387
    %405 = vmatpush.msra.mxu0 %v386
    %406 = vmatpush.msra.mxu0 %v385
    %407 = vmatpush.msra.mxu0 %v384
    %408 = vmatpush.msra.mxu0 %v383
    %409 = vmatpush.msra.mxu0 %v382
    %410 = vmatpush.msra.mxu0 %v381
    %411 = vmatpush.msra.mxu0 %v380
    %412 = vmatmul.f32.gmra.mxu0 %v372
    %v413 = vpop.f32.mrf.mxu0
    %v414 = vadd.f32 0.0, %v413
    %415 = vmatmul.f32.gmra.mxu0 %v373
    %v416 = vpop.f32.mrf.mxu0
    %v417 = vadd.f32 0.0, %v416
    %418 = vmatmul.f32.gmra.mxu0 %v374
    %v419 = vpop.f32.mrf.mxu0
    %v420 = vadd.f32 0.0, %v419
    %421 = vmatmul.f32.gmra.mxu0 %v375
    %v422 = vpop.f32.mrf.mxu0
    %v423 = vadd.f32 0.0, %v422
    %424 = vmatmul.f32.gmra.mxu0 %v376
    %v425 = vpop.f32.mrf.mxu0
    %v426 = vadd.f32 0.0, %v425
    %427 = vmatmul.f32.gmra.mxu0 %v377
    %v428 = vpop.f32.mrf.mxu0
    %v429 = vadd.f32 0.0, %v428
    %430 = vmatmul.f32.gmra.mxu0 %v378
    %v431 = vpop.f32.mrf.mxu0
    %v432 = vadd.f32 0.0, %v431
    %433 = vmatmul.f32.gmra.mxu0 %v379
    %v434 = vpop.f32.mrf.mxu0
    %v435 = vadd.f32 0.0, %v434
    %436 = vdwg.mxu0
    %437 = vst [vmem:[#allocation2] sm:$0xff] %v414
    %438 = vst [vmem:[#allocation2 + $0x8] sm:$0xff] %v417
    %439 = vst [vmem:[#allocation2 + $0x10] sm:$0xff] %v420
    %440 = vst [vmem:[#allocation2 + $0x18] sm:$0xff] %v423
    %441 = vst [vmem:[#allocation2 + $0x20] sm:$0xff] %v426
    %442 = vst [vmem:[#allocation2 + $0x28] sm:$0xff] %v429
    %443 = vst [vmem:[#allocation2 + $0x30] sm:$0xff] %v432
    %444 = vst [vmem:[#allocation2 + $0x38] sm:$0xff] %v435
    // Predicated region
    $region14: #{tpu_custom_call.1} parent=1 // pred_check
      _
    $region15: #{tpu_custom_call.1} parent=1 // pred_check_branch
      %446 = sbr.rel (0) target = $region17
    $region16: #{tpu_custom_call.1} parent=1 // pred_region
      %448 = vsyncadd [#allocation3], 0
      %s449 = sshll.u32 [#allocation2], 4
      %s450 = int_to_ptr.vmem [resolvable:$true] %s449
      %s451 = sshll.u32 %s3, 4
      %s452 = int_to_ptr.hbm [resolvable:$true] %s451
      %457 = dma.vmem_to_hbm [thread:$0]  %s450, 1024, %s452, [#allocation3], 128, 128, 8
    $region17: #{tpu_custom_call.1} parent=1 // pred_fallthru
      _
    // Predicated region
    $region18: #{tpu_custom_call.1} parent=1 // pred_check
      _
    $region19: #{tpu_custom_call.1} parent=1 // pred_check_branch
      %459 = sbr.rel (0) target = $region21
    $region20: #{tpu_custom_call.1} parent=1 // pred_region
      %461 = dma.done [#allocation3], 1024
    $region21: #{tpu_custom_call.1} parent=1 // pred_fallthru
      _
    %462 = vsyncpa [#allocation3], 1

</llo_original>
